<compile_context>
chip_gen: v6e
topology: v6e:2x2x1
jax: 0.10.0
libtpu: 0.0.40
codegen_flags: <defaults>
</compile_context>

<pallas_src>
import functools

import jax
import jax.numpy as jnp
from jax.experimental import pallas as pl
from jax.experimental.pallas import tpu as pltpu

EPS = 1e-5
LANES = 128
FEAT = 30     # hidden width
FIN = 11      # input features
W3K = 32      # w3 stored as (32, 128): contraction dim padded 30 -> 32

# --- packed parameter slab layout (rows of a (56, 128) f32 array, one DMA) -----------
# row 0      : b1      (lanes 0:30)
# row 1      : gamma2  (lanes 0:30)
# row 2      : beta2   (lanes 0:30)
# row 3      : b3      (lanes 0:30)
# row 4      : gamma4  (lanes 0:30)
# row 5      : beta4   (lanes 0:30)
# row 6      : w5 as a row (lanes 0:30)
# row 7      : b5 scalar at lane 0
# rows 8:19  : w1 (11 x 30, lanes 0:30)
# rows 24:56 : w3 (30 x 30) zero-padded to (32, 128)
ROW_B1, ROW_G2, ROW_BE2, ROW_B3, ROW_G4, ROW_BE4, ROW_W5, ROW_B5 = range(8)
ROW_W1 = 8
ROW_W3 = 24
PACK_ROWS = ROW_W3 + W3K  # 56


def _slab_views(p_ref):
    """Static, lane-aligned slices of the packed parameter slab."""
    b1 = p_ref[ROW_B1:ROW_B1 + 1, :]
    g2 = p_ref[ROW_G2:ROW_G2 + 1, :]
    be2 = p_ref[ROW_BE2:ROW_BE2 + 1, :]
    b3 = p_ref[ROW_B3:ROW_B3 + 1, :]
    g4 = p_ref[ROW_G4:ROW_G4 + 1, :]
    be4 = p_ref[ROW_BE4:ROW_BE4 + 1, :]
    w5r = p_ref[ROW_W5:ROW_W5 + 1, :]              # (1, 128), lanes 30: zero
    b5 = p_ref[ROW_B5:ROW_B5 + 1, 0:1]             # (1, 1)
    w1 = p_ref[ROW_W1:ROW_W1 + FIN, :]             # (11, 128), lanes 30: zero
    w3 = p_ref[ROW_W3:ROW_W3 + W3K, :]             # (32, 128), zero outside 30x30
    return b1, g2, be2, b3, g4, be4, w5r, b5, w1, w3


def _bn_scale_shift(s, ss, gamma, beta, inv_b):
    """Folded train-mode BatchNorm affine from per-feature sum / sum-of-squares.

    scale = gamma * rsqrt(var + eps);  shift = beta - mean * scale.
    var = E[h^2] - E[h]^2, clamped at 0.  Post-ReLU activations are O(1) here so f32
    cancellation error is far below eps; padding lanes (gamma = beta = 0) stay exactly 0.
    All arithmetic is on (1, 128) rows, so only two elementwise ops touch the (B,128) tile.
    """
    mean = s * inv_b
    var = jnp.maximum(ss * inv_b - mean * mean, 0.0)
    scale = jax.lax.rsqrt(var + EPS) * gamma
    shift = beta - mean * scale
    return scale, shift


# ---------------------------------------------------------------------------
# Small-batch fast path: whole problem in one VMEM block, no grid.
# ---------------------------------------------------------------------------
def mlp_bn_kernel_single(x_ref, p_ref, o_ref):
    x = x_ref[...]                                   # (B, 11) f32
    inv_b = 1.0 / x.shape[0]                         # static Python float
    b1, g2, be2, b3, g4, be4, w5r, b5, w1, w3 = _slab_views(p_ref)

    # layer1: Linear(11, 30) + ReLU  (result at 128-lane padded width)
    # TODO(synk): on v5e an 11-step VPU broadcast-MAC may beat this latency-exposed MXU pass;
    #             needs a bundle-dump measurement before committing.
    h = jnp.maximum(jnp.dot(x, w1, preferred_element_type=jnp.float32) + b1, 0.0)
    # layer2: BatchNorm1d(30) + ReLU (folded scale/shift)
    sc, sh = _bn_scale_shift(jnp.sum(h, axis=0, keepdims=True),
                             jnp.sum(h * h, axis=0, keepdims=True), g2, be2, inv_b)
    h = jnp.maximum(h * sc + sh, 0.0)
    # layer3: Linear(30, 30) + ReLU as (B,32) x (32,128); lanes 30+ of h are zero
    h = jnp.maximum(jnp.dot(h[:, :W3K], w3, preferred_element_type=jnp.float32) + b3, 0.0)
    # layer4: BatchNorm1d(30) + ReLU
    sc, sh = _bn_scale_shift(jnp.sum(h, axis=0, keepdims=True),
                             jnp.sum(h * h, axis=0, keepdims=True), g4, be4, inv_b)
    h = jnp.maximum(h * sc + sh, 0.0)
    # layer5: Linear(30, 1) + ReLU as VPU multiply + XLU lane reduce (no N=1 MXU pass)
    y = jnp.sum(h * w5r, axis=-1, keepdims=True) + b5
    o_ref[...] = jnp.maximum(y, 0.0).astype(o_ref.dtype)


# ---------------------------------------------------------------------------
# Large-batch path: 3-phase batch-tiled kernel.
#   phase 0: layer1+ReLU per tile, accumulate BN2 sum / sumsq across tiles
#   phase 1: recompute layer1, apply BN2+ReLU, layer3+ReLU, accumulate BN4 stats
#   phase 2: recompute, apply BN4+ReLU, layer5+ReLU, write output
# Recomputation is cheap (tiny matmuls); BN batch statistics span all tiles, so they
# live in a persistent VMEM scratch and both grid axes are sequential ("arbitrary").
# ---------------------------------------------------------------------------
def mlp_bn_kernel_tiled(x_ref, p_ref, o_ref, stat_ref, *, inv_b):
    phase = pl.program_id(0)
    tile = pl.program_id(1)

    @pl.when(jnp.logical_and(phase == 0, tile == 0))
    def _():
        stat_ref[...] = jnp.zeros_like(stat_ref)

    x = x_ref[...]                                   # (TB, 11)
    b1, g2, be2, b3, g4, be4, w5r, b5, w1, w3 = _slab_views(p_ref)

    # layer1 (recomputed every phase)
    h1 = jnp.maximum(jnp.dot(x, w1, preferred_element_type=jnp.float32) + b1, 0.0)

    @pl.when(phase == 0)
    def _():
        stat_ref[0:1, :] += jnp.sum(h1, axis=0, keepdims=True)
        stat_ref[1:2, :] += jnp.sum(h1 * h1, axis=0, keepdims=True)

    @pl.when(phase >= 1)
    def _():
        sc1, sh1 = _bn_scale_shift(stat_ref[0:1, :], stat_ref[1:2, :], g2, be2, inv_b)
        h2 = jnp.maximum(h1 * sc1 + sh1, 0.0)
        h3 = jnp.maximum(
            jnp.dot(h2[:, :W3K], w3, preferred_element_type=jnp.float32) + b3, 0.0)

        @pl.when(phase == 1)
        def _():
            stat_ref[2:3, :] += jnp.sum(h3, axis=0, keepdims=True)
            stat_ref[3:4, :] += jnp.sum(h3 * h3, axis=0, keepdims=True)

        @pl.when(phase == 2)
        def _():
            sc2, sh2 = _bn_scale_shift(stat_ref[2:3, :], stat_ref[3:4, :], g4, be4, inv_b)
            h4 = jnp.maximum(h3 * sc2 + sh2, 0.0)
            y = jnp.sum(h4 * w5r, axis=-1, keepdims=True) + b5
            o_ref[...] = jnp.maximum(y, 0.0).astype(o_ref.dtype)


# ---------------------------------------------------------------------------
# Params / packing / wrapper / reference
# ---------------------------------------------------------------------------
def init_params(key):
    """PyTorch-style defaults: Linear ~ U(-1/sqrt(fan_in), ...), BN gamma=1, beta=0.
    Weights stored as (in, out)."""
    keys = jax.random.split(key, 3)

    def lin(k, fan_in, fan_out):
        kw, kb = jax.random.split(k)
        bound = 1.0 / jnp.sqrt(fan_in)
        w = jax.random.uniform(kw, (fan_in, fan_out), jnp.float32, -bound, bound)
        b = jax.random.uniform(kb, (1, fan_out), jnp.float32, -bound, bound)
        return w, b

    w1, b1 = lin(keys[0], FIN, FEAT)
    w3, b3 = lin(keys[1], FEAT, FEAT)
    w5, b5 = lin(keys[2], FEAT, 1)
    g2, be2 = jnp.ones((1, FEAT), jnp.float32), jnp.zeros((1, FEAT), jnp.float32)
    g4, be4 = jnp.ones((1, FEAT), jnp.float32), jnp.zeros((1, FEAT), jnp.float32)
    return (w1, b1, g2, be2, w3, b3, g4, be4, w5, b5)


def pack_params(params):
    """Pack all parameters into one (56, 128) f32 slab => a single ~28 KiB VMEM input."""
    w1, b1, g2, be2, w3, b3, g4, be4, w5, b5 = params
    slab = jnp.zeros((PACK_ROWS, LANES), jnp.float32)
    slab = slab.at[ROW_B1, :FEAT].set(b1.reshape(FEAT))
    slab = slab.at[ROW_G2, :FEAT].set(g2.reshape(FEAT))
    slab = slab.at[ROW_BE2, :FEAT].set(be2.reshape(FEAT))
    slab = slab.at[ROW_B3, :FEAT].set(b3.reshape(FEAT))
    slab = slab.at[ROW_G4, :FEAT].set(g4.reshape(FEAT))
    slab = slab.at[ROW_BE4, :FEAT].set(be4.reshape(FEAT))
    slab = slab.at[ROW_W5, :FEAT].set(w5.reshape(FEAT))
    slab = slab.at[ROW_B5, 0].set(b5.reshape(()))
    slab = slab.at[ROW_W1:ROW_W1 + FIN, :FEAT].set(w1)
    slab = slab.at[ROW_W3:ROW_W3 + FEAT, :FEAT].set(w3)
    return slab


def nn_model_forward(x, packed_params, *, tile_rows=512):
    B = x.shape[0]
    vmem = pl.BlockSpec(memory_space=pltpu.MemorySpace.VMEM)

    if B <= tile_rows:
        # Small batch: the whole problem fits one VMEM block; single-block fast path.
        return pl.pallas_call(
            mlp_bn_kernel_single,
            out_shape=jax.ShapeDtypeStruct((B, 1), jnp.float32),
            in_specs=[vmem, vmem],
            out_specs=vmem,
        )(x, packed_params)

    # Large batch: 3-phase batch-tiled kernel with a VMEM-resident param slab.
    assert B % tile_rows == 0, "pad the batch to a multiple of tile_rows"
    assert tile_rows % 8 == 0, "tile_rows must be sublane-aligned"
    n_tiles = B // tile_rows
    kernel = functools.partial(mlp_bn_kernel_tiled, inv_b=1.0 / B)
    return pl.pallas_call(
        kernel,
        out_shape=jax.ShapeDtypeStruct((B, 1), jnp.float32),
        grid_spec=pltpu.PrefetchScalarGridSpec(
            num_scalar_prefetch=0,
            grid=(3, n_tiles),
            in_specs=[
                pl.BlockSpec((tile_rows, FIN), lambda p, t: (t, 0)),
                # Param slab: same block index every step -> DMA'd once, stays resident.
                pl.BlockSpec((PACK_ROWS, LANES), lambda p, t: (0, 0)),
            ],
            out_specs=pl.BlockSpec((tile_rows, 1), lambda p, t: (t, 0)),
            scratch_shapes=[pltpu.VMEM((4, LANES), jnp.float32)],  # sum1, sumsq1, sum2, sumsq2
        ),
        compiler_params=pltpu.CompilerParams(
            # Both axes carry cross-step state (BN accumulators), so neither is "parallel".
            dimension_semantics=("arbitrary", "arbitrary"),
            vmem_limit_bytes=32 * 1024 * 1024,
        ),
    )(x, packed_params)


def reference_forward(x, params):
    """Pure-JAX reference matching the PyTorch module in train mode (batch stats)."""
    w1, b1, g2, be2, w3, b3, g4, be4, w5, b5 = params

    def bn(h, g, b):
        m = jnp.mean(h, axis=0, keepdims=True)
        v = jnp.mean((h - m) ** 2, axis=0, keepdims=True)
        return (h - m) / jnp.sqrt(v + EPS) * g + b

    h = jnp.maximum(x @ w1 + b1, 0.0)
    h = jnp.maximum(bn(h, g2, be2), 0.0)
    h = jnp.maximum(h @ w3 + b3, 0.0)
    h = jnp.maximum(bn(h, g4, be4), 0.0)
    return jnp.maximum(h @ w5 + b5, 0.0)


if __name__ == "__main__":
    key = jax.random.PRNGKey(0)
    kx, kp = jax.random.split(key)
    params = init_params(kp)
    slab = pack_params(params)

    # 1) Small batch: single-block fast path.
    B = 8
    x = jax.random.normal(kx, (B, FIN), jnp.float32)
    out = nn_model_forward(x, slab)
    jax.block_until_ready(out)
    ref = reference_forward(x, params)
    assert out.shape == (B, 1), out.shape
    assert bool(jnp.all(out >= 0.0)), "ReLU output must be non-negative"
    assert bool(jnp.allclose(out, ref, atol=2e-4, rtol=2e-4)), (out, ref)

    # 2) Larger batch: exercise the 3-phase batch-tiled path (cross-tile BN stats).
    B2 = 64
    x2 = jax.random.normal(jax.random.PRNGKey(1), (B2, FIN), jnp.float32)
    out2 = nn_model_forward(x2, slab, tile_rows=16)
    jax.block_until_ready(out2)
    ref2 = reference_forward(x2, params)
    assert out2.shape == (B2, 1), out2.shape
    assert bool(jnp.all(out2 >= 0.0)), "ReLU output must be non-negative"
    assert bool(jnp.allclose(out2, ref2, atol=2e-4, rtol=2e-4)), (out2, ref2)

    print("KERNEL_OK")
</pallas_src>

<mosaic_0001>
module attributes {stable_mosaic.version = 11 : i64} {
  func.func @mlp_bn_kernel_single(%arg0: memref<8x11xf32, #tpu.memory_space<vmem>>, %arg1: memref<56x128xf32, #tpu.memory_space<vmem>>, %arg2: memref<8x1xf32, #tpu.memory_space<vmem>>) attributes {dimension_semantics = [], scalar_prefetch = 0 : i64, scratch_operands = 0 : i64, tpu.core_type = #tpu.core_type<tc>} {
    %c0 = arith.constant 0 : index
    %c0_0 = arith.constant 0 : index
    %0 = vector.load %arg0[%c0, %c0_0] : memref<8x11xf32, #tpu.memory_space<vmem>>, vector<8x11xf32>
    %c0_1 = arith.constant 0 : index
    %c0_2 = arith.constant 0 : index
    %1 = vector.load %arg1[%c0_1, %c0_2] : memref<56x128xf32, #tpu.memory_space<vmem>>, vector<1x128xf32>
    %c1 = arith.constant 1 : index
    %c0_3 = arith.constant 0 : index
    %2 = vector.load %arg1[%c1, %c0_3] : memref<56x128xf32, #tpu.memory_space<vmem>>, vector<1x128xf32>
    %c2 = arith.constant 2 : index
    %c0_4 = arith.constant 0 : index
    %3 = vector.load %arg1[%c2, %c0_4] : memref<56x128xf32, #tpu.memory_space<vmem>>, vector<1x128xf32>
    %c3 = arith.constant 3 : index
    %c0_5 = arith.constant 0 : index
    %4 = vector.load %arg1[%c3, %c0_5] : memref<56x128xf32, #tpu.memory_space<vmem>>, vector<1x128xf32>
    %c4 = arith.constant 4 : index
    %c0_6 = arith.constant 0 : index
    %5 = vector.load %arg1[%c4, %c0_6] : memref<56x128xf32, #tpu.memory_space<vmem>>, vector<1x128xf32>
    %c5 = arith.constant 5 : index
    %c0_7 = arith.constant 0 : index
    %6 = vector.load %arg1[%c5, %c0_7] : memref<56x128xf32, #tpu.memory_space<vmem>>, vector<1x128xf32>
    %c6 = arith.constant 6 : index
    %c0_8 = arith.constant 0 : index
    %7 = vector.load %arg1[%c6, %c0_8] : memref<56x128xf32, #tpu.memory_space<vmem>>, vector<1x128xf32>
    %c7 = arith.constant 7 : index
    %c0_9 = arith.constant 0 : index
    %8 = vector.load %arg1[%c7, %c0_9] : memref<56x128xf32, #tpu.memory_space<vmem>>, vector<1x1xf32>
    %c8 = arith.constant 8 : index
    %c0_10 = arith.constant 0 : index
    %9 = vector.load %arg1[%c8, %c0_10] : memref<56x128xf32, #tpu.memory_space<vmem>>, vector<11x128xf32>
    %c24 = arith.constant 24 : index
    %c0_11 = arith.constant 0 : index
    %10 = vector.load %arg1[%c24, %c0_11] : memref<56x128xf32, #tpu.memory_space<vmem>>, vector<32x128xf32>
    %cst = arith.constant dense<0.000000e+00> : vector<8x128xf32>
    %11 = tpu.matmul %0, %9, %cst {dimension_numbers = #tpu.dot_dimension_numbers<[1], [0], [0], [1], [0, 0, 1, 1], [], []>} : vector<8x11xf32>, vector<11x128xf32>, vector<8x128xf32> -> vector<8x128xf32>
    %12 = vector.broadcast %1 : vector<1x128xf32> to vector<8x128xf32>
    %13 = arith.addf %11, %12 : vector<8x128xf32>
    %cst_12 = arith.constant 0.000000e+00 : f32
    %14 = vector.broadcast %cst_12 : f32 to vector<8x128xf32>
    %15 = arith.maximumf %13, %14 : vector<8x128xf32>
    %cst_13 = arith.constant dense<0.000000e+00> : vector<128xf32>
    %16 = vector.multi_reduction <add>, %15, %cst_13 [0] : vector<8x128xf32> to vector<128xf32>
    %17 = vector.shape_cast %16 : vector<128xf32> to vector<1x128xf32>
    %18 = arith.mulf %15, %15 : vector<8x128xf32>
    %cst_14 = arith.constant dense<0.000000e+00> : vector<128xf32>
    %19 = vector.multi_reduction <add>, %18, %cst_14 [0] : vector<8x128xf32> to vector<128xf32>
    %20 = vector.shape_cast %19 : vector<128xf32> to vector<1x128xf32>
    %cst_15 = arith.constant 1.250000e-01 : f32
    %21 = vector.broadcast %cst_15 : f32 to vector<1x128xf32>
    %22 = arith.mulf %17, %21 : vector<1x128xf32>
    %cst_16 = arith.constant 1.250000e-01 : f32
    %23 = vector.broadcast %cst_16 : f32 to vector<1x128xf32>
    %24 = arith.mulf %20, %23 : vector<1x128xf32>
    %25 = arith.mulf %22, %22 : vector<1x128xf32>
    %26 = arith.subf %24, %25 : vector<1x128xf32>
    %cst_17 = arith.constant 0.000000e+00 : f32
    %27 = vector.broadcast %cst_17 : f32 to vector<1x128xf32>
    %28 = arith.maximumf %26, %27 : vector<1x128xf32>
    %cst_18 = arith.constant 9.99999974E-6 : f32
    %29 = vector.broadcast %cst_18 : f32 to vector<1x128xf32>
    %30 = arith.addf %28, %29 : vector<1x128xf32>
    %31 = math.rsqrt %30 : vector<1x128xf32>
    %32 = arith.mulf %31, %2 : vector<1x128xf32>
    %33 = arith.mulf %22, %32 : vector<1x128xf32>
    %34 = arith.subf %3, %33 : vector<1x128xf32>
    %35 = vector.broadcast %32 : vector<1x128xf32> to vector<8x128xf32>
    %36 = arith.mulf %15, %35 : vector<8x128xf32>
    %37 = vector.broadcast %34 : vector<1x128xf32> to vector<8x128xf32>
    %38 = arith.addf %36, %37 : vector<8x128xf32>
    %cst_19 = arith.constant 0.000000e+00 : f32
    %39 = vector.broadcast %cst_19 : f32 to vector<8x128xf32>
    %40 = arith.maximumf %38, %39 : vector<8x128xf32>
    %41 = vector.extract_strided_slice %40 {offsets = [0, 0], sizes = [8, 32], strides = [1, 1]} : vector<8x128xf32> to vector<8x32xf32>
    %cst_20 = arith.constant dense<0.000000e+00> : vector<8x128xf32>
    %42 = tpu.matmul %41, %10, %cst_20 {dimension_numbers = #tpu.dot_dimension_numbers<[1], [0], [0], [1], [0, 0, 1, 1], [], []>} : vector<8x32xf32>, vector<32x128xf32>, vector<8x128xf32> -> vector<8x128xf32>
    %43 = vector.broadcast %4 : vector<1x128xf32> to vector<8x128xf32>
    %44 = arith.addf %42, %43 : vector<8x128xf32>
    %cst_21 = arith.constant 0.000000e+00 : f32
    %45 = vector.broadcast %cst_21 : f32 to vector<8x128xf32>
    %46 = arith.maximumf %44, %45 : vector<8x128xf32>
    %cst_22 = arith.constant dense<0.000000e+00> : vector<128xf32>
    %47 = vector.multi_reduction <add>, %46, %cst_22 [0] : vector<8x128xf32> to vector<128xf32>
    %48 = vector.shape_cast %47 : vector<128xf32> to vector<1x128xf32>
    %49 = arith.mulf %46, %46 : vector<8x128xf32>
    %cst_23 = arith.constant dense<0.000000e+00> : vector<128xf32>
    %50 = vector.multi_reduction <add>, %49, %cst_23 [0] : vector<8x128xf32> to vector<128xf32>
    %51 = vector.shape_cast %50 : vector<128xf32> to vector<1x128xf32>
    %cst_24 = arith.constant 1.250000e-01 : f32
    %52 = vector.broadcast %cst_24 : f32 to vector<1x128xf32>
    %53 = arith.mulf %48, %52 : vector<1x128xf32>
    %cst_25 = arith.constant 1.250000e-01 : f32
    %54 = vector.broadcast %cst_25 : f32 to vector<1x128xf32>
    %55 = arith.mulf %51, %54 : vector<1x128xf32>
    %56 = arith.mulf %53, %53 : vector<1x128xf32>
    %57 = arith.subf %55, %56 : vector<1x128xf32>
    %cst_26 = arith.constant 0.000000e+00 : f32
    %58 = vector.broadcast %cst_26 : f32 to vector<1x128xf32>
    %59 = arith.maximumf %57, %58 : vector<1x128xf32>
    %cst_27 = arith.constant 9.99999974E-6 : f32
    %60 = vector.broadcast %cst_27 : f32 to vector<1x128xf32>
    %61 = arith.addf %59, %60 : vector<1x128xf32>
    %62 = math.rsqrt %61 : vector<1x128xf32>
    %63 = arith.mulf %62, %5 : vector<1x128xf32>
    %64 = arith.mulf %53, %63 : vector<1x128xf32>
    %65 = arith.subf %6, %64 : vector<1x128xf32>
    %66 = vector.broadcast %63 : vector<1x128xf32> to vector<8x128xf32>
    %67 = arith.mulf %46, %66 : vector<8x128xf32>
    %68 = vector.broadcast %65 : vector<1x128xf32> to vector<8x128xf32>
    %69 = arith.addf %67, %68 : vector<8x128xf32>
    %cst_28 = arith.constant 0.000000e+00 : f32
    %70 = vector.broadcast %cst_28 : f32 to vector<8x128xf32>
    %71 = arith.maximumf %69, %70 : vector<8x128xf32>
    %72 = vector.broadcast %7 : vector<1x128xf32> to vector<8x128xf32>
    %73 = arith.mulf %71, %72 : vector<8x128xf32>
    %cst_29 = arith.constant dense<0.000000e+00> : vector<8xf32>
    %74 = vector.multi_reduction <add>, %73, %cst_29 [1] : vector<8x128xf32> to vector<8xf32>
    %75 = vector.shape_cast %74 : vector<8xf32> to vector<8x1xf32>
    %76 = vector.broadcast %8 : vector<1x1xf32> to vector<8x1xf32>
    %77 = arith.addf %75, %76 : vector<8x1xf32>
    %cst_30 = arith.constant 0.000000e+00 : f32
    %78 = vector.broadcast %cst_30 : f32 to vector<8x1xf32>
    %79 = arith.maximumf %77, %78 : vector<8x1xf32>
    %c0_31 = arith.constant 0 : index
    %c0_32 = arith.constant 0 : index
    %80 = vector.load %arg2[%c0_31, %c0_32] : memref<8x1xf32, #tpu.memory_space<vmem>>, vector<8x1xf32>
    tpu.vector_store %arg2[%c0_31, %c0_32], %79 {strides = array<i32>} : memref<8x1xf32, #tpu.memory_space<vmem>>, vector<8x1xf32>,
    return
  }
}

</mosaic_0001>

<llo_original>
// kernel: tpu_custom_call.1
$region0: #{tpu_custom_call.1}
  #allocation0 [shape = 'u32[]', space=smem, size = 0x4, offset = 0x4, fixed_abs, tag = 'smem constant byte address 0x4 - core index']
  #allocation1 [shape = 'u32[144,128]{1,0:T(1,128)}', space=vmem, size = 0x12000, scoped, tag = 'internal scratch']
  %s0 = inlined_call_operand.hbm [shape: f32[8,11], index: 0, kind: input, shape index: {}]
  %s1 = inlined_call_operand.hbm [shape: f32[56,128], index: 1, kind: input, shape index: {}]
  %s2 = inlined_call_operand.vmem [shape: f32[8,1], index: 2, kind: output, shape index: {}]
  %s3 = sld [smem:[#allocation0]]
  $region26: #{tpu_custom_call.1} parent=0
    _
  %s5 = ssub.s32 1, %s3
  %s6 = scalar_select 0, %s5, %s3
  $region1: #{tpu_custom_call.1} parent=0
    #allocation2 [shape = 'u8[4096]{0}', space=vmem, size = 0x1000, scoped, tag = 'input window, operand 0, single buffered']
    #allocation3 [shape = 's32[1]{0}', space=sflag, size = 0x4, scoped, tag = 'scoped memory for tpu_custom_call.1']
    #allocation4 [shape = 'u8[28672]{0}', space=vmem, size = 0x7000, scoped, tag = 'input window, operand 1, single buffered']
    #allocation5 [shape = 's32[1]{0}', space=sflag, size = 0x4, scoped, tag = 'scoped memory for tpu_custom_call.1']
    %7 = vsyncpa [#allocation3], 0
    %8 = vsyncpa [#allocation5], 0
    // Predicated region
    $region2: #{tpu_custom_call.1} parent=1 // pred_check
      _
    $region3: #{tpu_custom_call.1} parent=1 // pred_check_branch
      %10 = sbr.rel (0) target = $region5
    $region4: #{tpu_custom_call.1} parent=1 // pred_region
      %s12 = ssub.s32 128, 128
      %13 = vsyncadd [#allocation3], %s12
      %s15 = sshll.u32 [#allocation2], 4
      %s16 = int_to_ptr.vmem [resolvable:$true] %s15
      %18 = dma.hbm_to_vmem [thread:$0]  %s0, 128, %s16, [#allocation3]
    $region5: #{tpu_custom_call.1} parent=1 // pred_fallthru
      _
    // Predicated region
    $region6: #{tpu_custom_call.1} parent=1 // pred_check
      _
    $region7: #{tpu_custom_call.1} parent=1 // pred_check_branch
      %20 = sbr.rel (0) target = $region9
    $region8: #{tpu_custom_call.1} parent=1 // pred_region
      %s22 = ssub.s32 896, 896
      %23 = vsyncadd [#allocation5], %s22
      %s24 = sshll.u32 [#allocation4], 4
      %s25 = int_to_ptr.vmem [resolvable:$true] %s24
      %30 = dma.hbm_to_vmem [thread:$0]  %s1, 896, %s25, [#allocation5], 128, 128, 8
    $region9: #{tpu_custom_call.1} parent=1 // pred_fallthru
      _
    // Predicated region
    $region10: #{tpu_custom_call.1} parent=1 // pred_check
      _
    $region11: #{tpu_custom_call.1} parent=1 // pred_check_branch
      %32 = sbr.rel (0) target = $region13
    $region12: #{tpu_custom_call.1} parent=1 // pred_region
      %33 = dma.done [#allocation3], 128
    $region13: #{tpu_custom_call.1} parent=1 // pred_fallthru
      _
    // Predicated region
    $region14: #{tpu_custom_call.1} parent=1 // pred_check
      _
    $region15: #{tpu_custom_call.1} parent=1 // pred_check_branch
      %35 = sbr.rel (0) target = $region17
    $region16: #{tpu_custom_call.1} parent=1 // pred_region
      %36 = dma.done [#allocation5], 896
    $region17: #{tpu_custom_call.1} parent=1 // pred_fallthru
      _
    %v37 = vld [vmem:[#allocation2] sm:$0xff]
    %v38 = vld [vmem:[#allocation4] sm:$0x1]
    %v39 = vld [vmem:[#allocation4 + $0x1] sm:$0x1]
    %v40 = vld [vmem:[#allocation4 + $0x2] sm:$0x1]
    %v41 = vld [vmem:[#allocation4 + $0x3] sm:$0x1]
    %v42 = vld [vmem:[#allocation4 + $0x4] sm:$0x1]
    %v43 = vld [vmem:[#allocation4 + $0x5] sm:$0x1]
    %v44 = vld [vmem:[#allocation4 + $0x6] sm:$0x1]
    %v45 = vld [vmem:[#allocation4 + $0x7] sm:$0x1]
    %v46 = vld [vmem:[#allocation4 + $0x8] sm:$0xff]
    %v47 = vld [vmem:[#allocation4 + $0x10] sm:$0x7]
    %v48 = vld [vmem:[#allocation4 + $0x18] sm:$0xff]
    %v49 = vld [vmem:[#allocation4 + $0x20] sm:$0xff]
    %v50 = vld [vmem:[#allocation4 + $0x28] sm:$0xff]
    %v51 = vld [vmem:[#allocation4 + $0x30] sm:$0xff]
    %v52 = vlaneseq
    %v53 = vshrl.u32 %v52, 7
    %v54 = vsub.s32 0, %v53
    %v55 = vrot.slane %v38, %v54
    %vm56 = vcmask 89088
    %v58 = vsel %vm56, %v37, 0
    %vm60 = vcmask 1042432
    %v62 = vsel %vm60, %v47, 0
    %64 = vmatprep.subr.mxu0 0.0
    %65 = vmatpush1.msra.mxu0 0.0
    %66 = vmatprep.subr.mxu0 0.0
    %67 = vmatpush1.msra.mxu0 0.0
    %68 = vmatprep.subr.mxu0 0.0
    %69 = vmatpush1.msra.mxu0 0.0
    %70 = vmatprep.subr.mxu0 0.0
    %71 = vmatpush1.msra.mxu0 0.0
    %72 = vmatprep.subr.mxu0 0.0
    %73 = vmatpush1.msra.mxu0 0.0
    %74 = vmatprep.subr.mxu0 0.0
    %75 = vmatpush1.msra.mxu0 0.0
    %76 = vmatprep.subr.mxu0 0.0
    %77 = vmatpush1.msra.mxu0 0.0
    %78 = vmatprep.subr.mxu0 0.0
    %79 = vmatpush1.msra.mxu0 0.0
    %80 = vmatprep.subr.mxu0 0.0
    %81 = vmatpush1.msra.mxu0 0.0
    %82 = vmatprep.subr.mxu0 0.0
    %83 = vmatpush1.msra.mxu0 0.0
    %84 = vmatprep.subr.mxu0 0.0
    %85 = vmatpush1.msra.mxu0 0.0
    %86 = vmatprep.subr.mxu0 0.0
    %87 = vmatpush1.msra.mxu0 0.0
    %88 = vmatprep.subr.mxu0 0.0
    %89 = vmatpush1.msra.mxu0 0.0
    %90 = vmatprep.subr.mxu0 0.0
    %91 = vmatpush1.msra.mxu0 0.0
    %92 = vmatprep.subr.mxu0 0.0
    %93 = vmatpush1.msra.mxu0 %v62
    %94 = vmatprep.subr.mxu0 0.0
    %95 = vmatpush1.msra.mxu0 %v46
    %96 = vmatprep.subr.mxu0 0.0
    %97 = vmatpush2.msra.mxu0 0.0
    %98 = vmatprep.subr.mxu0 0.0
    %99 = vmatpush2.msra.mxu0 0.0
    %100 = vmatprep.subr.mxu0 0.0
    %101 = vmatpush2.msra.mxu0 0.0
    %102 = vmatprep.subr.mxu0 0.0
    %103 = vmatpush2.msra.mxu0 0.0
    %104 = vmatprep.subr.mxu0 0.0
    %105 = vmatpush2.msra.mxu0 0.0
    %106 = vmatprep.subr.mxu0 0.0
    %107 = vmatpush2.msra.mxu0 0.0
    %108 = vmatprep.subr.mxu0 0.0
    %109 = vmatpush2.msra.mxu0 0.0
    %110 = vmatprep.subr.mxu0 0.0
    %111 = vmatpush2.msra.mxu0 0.0
    %112 = vmatprep.subr.mxu0 0.0
    %113 = vmatpush2.msra.mxu0 0.0
    %114 = vmatprep.subr.mxu0 0.0
    %115 = vmatpush2.msra.mxu0 0.0
    %116 = vmatprep.subr.mxu0 0.0
    %117 = vmatpush2.msra.mxu0 0.0
    %118 = vmatprep.subr.mxu0 0.0
    %119 = vmatpush2.msra.mxu0 0.0
    %120 = vmatprep.subr.mxu0 0.0
    %121 = vmatpush2.msra.mxu0 0.0
    %122 = vmatprep.subr.mxu0 0.0
    %123 = vmatpush2.msra.mxu0 0.0
    %124 = vmatprep.subr.mxu0 0.0
    %125 = vmatpush2.msra.mxu0 0.0
    %126 = vmatprep.subr.mxu0 0.0
    %127 = vmatpush2.msra.mxu0 0.0
    %128 = vmatprep.mubr.f32.mxu0 0.0
    %129 = vmatmul.mubr.f32.gmra.mxu0 %v58
    %v130 = vpop.f32.mrf.mxu0
    %v131 = vadd.f32 %v55, %v130
    %v132 = vpop.f32.mrf.mxu0
    %133 = vdwg.mxu0
    %v134 = vmax.f32 %v131, 0.0
    %v135 = vrot.slane %v134, 4
    %v136 = vadd.f32 %v134, %v135
    %v137 = vrot.slane %v136, 2
    %v138 = vadd.f32 %v136, %v137
    %v139 = vrot.slane %v138, 1
    %v140 = vadd.f32 %v138, %v139
    %v141 = vmul.f32 %v134, %v134
    %v142 = vrot.slane %v141, 4
    %v143 = vadd.f32 %v141, %v142
    %v144 = vrot.slane %v143, 2
    %v145 = vadd.f32 %v143, %v144
    %v146 = vrot.slane %v145, 1
    %v147 = vadd.f32 %v145, %v146
    %v148 = vmul.f32 %v140, 0.125
    %v149 = vmul.f32 %v147, 0.125
    %v150 = vmul.f32 %v148, %v148
    %v151 = vsub.f32 %v149, %v150
    %v152 = vmax.f32 %v151, 0.0
    %v153 = vadd.f32 %v152, 1e-05
    %v154 = vrsqrt.pop %v153
    %v155 = vmul.f32 %v154, %v39
    %v156 = vmul.f32 %v148, %v155
    %v157 = vsub.f32 %v40, %v156
    %v158 = vlaneseq
    %v159 = vshrl.u32 %v158, 7
    %v160 = vsub.s32 0, %v159
    %v161 = vrot.slane %v155, %v160
    %v162 = vmul.f32 %v134, %v161
    %v163 = vlaneseq
    %v164 = vshrl.u32 %v163, 7
    %v165 = vsub.s32 0, %v164
    %v166 = vrot.slane %v157, %v165
    %v167 = vadd.f32 %v162, %v166
    %v168 = vmax.f32 %v167, 0.0
    %v169 = vlaneseq
    %v170 = vshrl.u32 %v169, 7
    %v171 = vsub.s32 0, %v170
    %v172 = vrot.slane %v41, %v171
    %vm173 = vcmask 261120
    %v175 = vsel %vm173, %v168, 0
    %177 = vmatprep.subr.mxu0 0.0
    %178 = vmatpush1.msra.mxu0 0.0
    %179 = vmatprep.subr.mxu0 0.0
    %180 = vmatpush1.msra.mxu0 0.0
    %181 = vmatprep.subr.mxu0 0.0
    %182 = vmatpush1.msra.mxu0 0.0
    %183 = vmatprep.subr.mxu0 0.0
    %184 = vmatpush1.msra.mxu0 0.0
    %185 = vmatprep.subr.mxu0 0.0
    %186 = vmatpush1.msra.mxu0 0.0
    %187 = vmatprep.subr.mxu0 0.0
    %188 = vmatpush1.msra.mxu0 0.0
    %189 = vmatprep.subr.mxu0 0.0
    %190 = vmatpush1.msra.mxu0 0.0
    %191 = vmatprep.subr.mxu0 0.0
    %192 = vmatpush1.msra.mxu0 0.0
    %193 = vmatprep.subr.mxu0 0.0
    %194 = vmatpush1.msra.mxu0 0.0
    %195 = vmatprep.subr.mxu0 0.0
    %196 = vmatpush1.msra.mxu0 0.0
    %197 = vmatprep.subr.mxu0 0.0
    %198 = vmatpush1.msra.mxu0 0.0
    %199 = vmatprep.subr.mxu0 0.0
    %200 = vmatpush1.msra.mxu0 0.0
    %201 = vmatprep.subr.mxu0 0.0
    %202 = vmatpush1.msra.mxu0 %v51
    %203 = vmatprep.subr.mxu0 0.0
    %204 = vmatpush1.msra.mxu0 %v50
    %205 = vmatprep.subr.mxu0 0.0
    %206 = vmatpush1.msra.mxu0 %v49
    %207 = vmatprep.subr.mxu0 0.0
    %208 = vmatpush1.msra.mxu0 %v48
    %209 = vmatprep.subr.mxu0 0.0
    %210 = vmatpush2.msra.mxu0 0.0
    %211 = vmatprep.subr.mxu0 0.0
    %212 = vmatpush2.msra.mxu0 0.0
    %213 = vmatprep.subr.mxu0 0.0
    %214 = vmatpush2.msra.mxu0 0.0
    %215 = vmatprep.subr.mxu0 0.0
    %216 = vmatpush2.msra.mxu0 0.0
    %217 = vmatprep.subr.mxu0 0.0
    %218 = vmatpush2.msra.mxu0 0.0
    %219 = vmatprep.subr.mxu0 0.0
    %220 = vmatpush2.msra.mxu0 0.0
    %221 = vmatprep.subr.mxu0 0.0
    %222 = vmatpush2.msra.mxu0 0.0
    %223 = vmatprep.subr.mxu0 0.0
    %224 = vmatpush2.msra.mxu0 0.0
    %225 = vmatprep.subr.mxu0 0.0
    %226 = vmatpush2.msra.mxu0 0.0
    %227 = vmatprep.subr.mxu0 0.0
    %228 = vmatpush2.msra.mxu0 0.0
    %229 = vmatprep.subr.mxu0 0.0
    %230 = vmatpush2.msra.mxu0 0.0
    %231 = vmatprep.subr.mxu0 0.0
    %232 = vmatpush2.msra.mxu0 0.0
    %233 = vmatprep.subr.mxu0 0.0
    %234 = vmatpush2.msra.mxu0 0.0
    %235 = vmatprep.subr.mxu0 0.0
    %236 = vmatpush2.msra.mxu0 0.0
    %237 = vmatprep.subr.mxu0 0.0
    %238 = vmatpush2.msra.mxu0 0.0
    %239 = vmatprep.subr.mxu0 0.0
    %240 = vmatpush2.msra.mxu0 0.0
    %241 = vmatprep.mubr.f32.mxu0 0.0
    %242 = vmatmul.mubr.f32.gmra.mxu0 %v175
    %v243 = vpop.f32.mrf.mxu0
    %v244 = vadd.f32 %v172, %v243
    %v245 = vpop.f32.mrf.mxu0
    %246 = vdwg.mxu0
    %v247 = vmax.f32 %v244, 0.0
    %v248 = vrot.slane %v247, 4
    %v249 = vadd.f32 %v247, %v248
    %v250 = vrot.slane %v249, 2
    %v251 = vadd.f32 %v249, %v250
    %v252 = vrot.slane %v251, 1
    %v253 = vadd.f32 %v251, %v252
    %v254 = vmul.f32 %v247, %v247
    %v255 = vrot.slane %v254, 4
    %v256 = vadd.f32 %v254, %v255
    %v257 = vrot.slane %v256, 2
    %v258 = vadd.f32 %v256, %v257
    %v259 = vrot.slane %v258, 1
    %v260 = vadd.f32 %v258, %v259
    %v261 = vmul.f32 %v253, 0.125
    %v262 = vmul.f32 %v260, 0.125
    %v263 = vmul.f32 %v261, %v261
    %v264 = vsub.f32 %v262, %v263
    %v265 = vmax.f32 %v264, 0.0
    %v266 = vadd.f32 %v265, 1e-05
    %v267 = vrsqrt.pop %v266
    %v268 = vmul.f32 %v267, %v42
    %v269 = vmul.f32 %v261, %v268
    %v270 = vsub.f32 %v43, %v269
    %v271 = vlaneseq
    %v272 = vshrl.u32 %v271, 7
    %v273 = vsub.s32 0, %v272
    %v274 = vrot.slane %v268, %v273
    %v275 = vmul.f32 %v247, %v274
    %v276 = vlaneseq
    %v277 = vshrl.u32 %v276, 7
    %v278 = vsub.s32 0, %v277
    %v279 = vrot.slane %v270, %v278
    %v280 = vadd.f32 %v275, %v279
    %v281 = vmax.f32 %v280, 0.0
    %v282 = vlaneseq
    %v283 = vshrl.u32 %v282, 7
    %v284 = vsub.s32 0, %v283
    %v285 = vrot.slane %v44, %v284
    %v286 = vmul.f32 %v281, %v285
    %287 = vadd.xlane.f32.xlu0 %v286
    %v288 = vpop.xlane.xlu0 %287
    %v289 = vlaneseq
    %v290 = vshrl.u32 %v289, 7
    %v291 = vsub.s32 0, %v290
    %v292 = vrot.slane %v45, %v291
    %v293 = vadd.f32 %v288, %v292
    %v294 = vmax.f32 %v293, 0.0
    %vm295 = vcmask 7168
    %296 = vst.msk [vmem:[%s2] sm:$0xff] %vm295, %v294
    // Predicated region
    $region18: #{tpu_custom_call.1} parent=1 // pred_check
      _
    $region19: #{tpu_custom_call.1} parent=1 // pred_check_branch
      %298 = sbr.rel (0) target = $region21
    $region20: #{tpu_custom_call.1} parent=1 // pred_region
      _
    $region21: #{tpu_custom_call.1} parent=1 // pred_fallthru
      _
    // Predicated region
    $region22: #{tpu_custom_call.1} parent=1 // pred_check
      _
    $region23: #{tpu_custom_call.1} parent=1 // pred_check_branch
      %300 = sbr.rel (0) target = $region25
    $region24: #{tpu_custom_call.1} parent=1 // pred_region
      _
    $region25: #{tpu_custom_call.1} parent=1 // pred_fallthru
      _
    %301 = vsyncpa [#allocation3], 1
    %302 = vsyncpa [#allocation5], 1

</llo_original>
